<compile_context>
chip_gen: v6e
topology: v6e:2x2x1
jax: 0.10.0
libtpu: 0.0.40
codegen_flags: <defaults>
</compile_context>

<pallas_src>
import jax
import jax.numpy as jnp
from jax.experimental import pallas as pl
from jax.experimental.pallas import tpu as pltpu


def _sobelxy_kernel(x_ref, o_ref):
    # x_ref / o_ref: (B, H, W) -- B whole (n, c) planes per grid step.
    x = x_ref[...].astype(jnp.float32)
    B, H, W = x.shape

    # Vertical neighbours with zero padding at the top/bottom image border.
    zrow = jnp.zeros((B, 1, W), jnp.float32)
    up = jnp.concatenate([zrow, x[:, : H - 1, :]], axis=1)   # x[i-1, j]
    dn = jnp.concatenate([x[:, 1:, :], zrow], axis=1)        # x[i+1, j]

    # Separable Sobel (cross-correlation, matching nn.Conv2d semantics):
    #   sx[i,j] = t1[i,j-1] - t1[i,j+1],        t1 = [1,2,1] vertical smooth
    #   sy[i,j] = t2[i,j-1] + 2*t2[i,j] + t2[i,j+1],  t2 = vertical difference
    t1 = up + 2.0 * x + dn
    t2 = up - dn

    # Horizontal neighbours with zero padding at the left/right image border.
    zcol = jnp.zeros((B, H, 1), jnp.float32)
    t1l = jnp.concatenate([zcol, t1[:, :, : W - 1]], axis=2)  # t1[., j-1]
    t1r = jnp.concatenate([t1[:, :, 1:], zcol], axis=2)       # t1[., j+1]
    t2l = jnp.concatenate([zcol, t2[:, :, : W - 1]], axis=2)
    t2r = jnp.concatenate([t2[:, :, 1:], zcol], axis=2)

    sx = t1l - t1r
    sy = t2l + 2.0 * t2 + t2r

    o_ref[...] = (jnp.abs(sx) + jnp.abs(sy)).astype(o_ref.dtype)


def _choose_plane_batch(num_planes, plane_bytes, target_block_bytes=2 << 20):
    """Largest divisor of num_planes whose input block stays under the VMEM
    target, while keeping >= 2 grid steps when possible (both v7x cores)."""
    max_b = max(1, target_block_bytes // max(plane_bytes, 1))
    if num_planes >= 2:
        max_b = min(max_b, max(1, num_planes // 2))
    best = 1
    for d in range(1, num_planes + 1):
        if num_planes % d == 0 and d <= max_b:
            best = d
    return best


def sobelxy(x):
    """x: (N, C, H, W) -> (N, C, H, W), |sobel_x(x)| + |sobel_y(x)| per channel."""
    N, C, H, W = x.shape
    planes = N * C
    xf = x.reshape(planes, H, W)

    itemsize = jnp.dtype(x.dtype).itemsize
    B = _choose_plane_batch(planes, H * W * itemsize)
    grid = (planes // B,)

    # Mem-bound hint: one read + one write of the tensor, ~11 VALU flops/pixel.
    bytes_accessed = 2 * planes * H * W * itemsize
    flops = 11 * planes * H * W

    out = pl.pallas_call(
        _sobelxy_kernel,
        out_shape=jax.ShapeDtypeStruct((planes, H, W), x.dtype),
        grid=grid,
        in_specs=[pl.BlockSpec((B, H, W), lambda i: (i, 0, 0))],
        out_specs=pl.BlockSpec((B, H, W), lambda i: (i, 0, 0)),
        compiler_params=pltpu.CompilerParams(
            dimension_semantics=("parallel",),
            vmem_limit_bytes=32 * 1024 * 1024,
        ),
        cost_estimate=pl.CostEstimate(
            flops=flops, transcendentals=0, bytes_accessed=bytes_accessed),
    )(xf)

    return out.reshape(N, C, H, W)


def _reference(x):
    """Pure-JAX reference (direct 3x3 tap loop) for a sanity check."""
    N, C, H, W = x.shape
    sobel = jnp.array([[1.0, 0.0, -1.0],
                       [2.0, 0.0, -2.0],
                       [1.0, 0.0, -1.0]], dtype=jnp.float32)
    xp = jnp.pad(x.astype(jnp.float32), ((0, 0), (0, 0), (1, 1), (1, 1)))
    sx = jnp.zeros((N, C, H, W), jnp.float32)
    sy = jnp.zeros((N, C, H, W), jnp.float32)
    for di in range(3):
        for dj in range(3):
            win = xp[:, :, di:di + H, dj:dj + W]
            sx = sx + sobel[di, dj] * win
            sy = sy + sobel.T[di, dj] * win
    return (jnp.abs(sx) + jnp.abs(sy)).astype(x.dtype)


if __name__ == "__main__":
    key = jax.random.PRNGKey(0)
    x = jax.random.normal(key, (2, 4, 16, 16), dtype=jnp.float32)

    out = sobelxy(x)
    out = jax.block_until_ready(out)

    ref = _reference(x)
    assert out.shape == x.shape and out.dtype == x.dtype
    assert jnp.allclose(out, ref, atol=1e-5, rtol=1e-5)

    print("KERNEL_OK")
</pallas_src>

<mosaic_0001>
module attributes {stable_mosaic.version = 11 : i64} {
  func.func @_sobelxy_kernel(%arg0: i32, %arg1: memref<4x16x16xf32, #tpu.memory_space<vmem>>, %arg2: memref<4x16x16xf32, #tpu.memory_space<vmem>>) attributes {dimension_semantics = [#tpu.dimension_semantics<parallel>], iteration_bounds = array<i64: 2>, scalar_prefetch = 0 : i64, scratch_operands = 0 : i64, tpu.core_type = #tpu.core_type<tc>, window_params = [{transform_indices = @transform_0, window_bounds = array<i64: 4, 16, 16>}, {transform_indices = @transform_1, window_bounds = array<i64: 4, 16, 16>}]} {
    %c0 = arith.constant 0 : index
    %c0_0 = arith.constant 0 : index
    %c0_1 = arith.constant 0 : index
    %0 = vector.load %arg1[%c0, %c0_0, %c0_1] : memref<4x16x16xf32, #tpu.memory_space<vmem>>, vector<4x16x16xf32>
    %cst = arith.constant 0.000000e+00 : f32
    %1 = vector.broadcast %cst : f32 to vector<4x1x16xf32>
    %2 = vector.extract_strided_slice %0 {offsets = [0, 0, 0], sizes = [4, 15, 16], strides = [1, 1, 1]} : vector<4x16x16xf32> to vector<4x15x16xf32>
    %3 = tpu.concatenate %1, %2 in 1 : vector<4x1x16xf32>, vector<4x15x16xf32> -> vector<4x16x16xf32>
    %4 = vector.extract_strided_slice %0 {offsets = [0, 1, 0], sizes = [4, 15, 16], strides = [1, 1, 1]} : vector<4x16x16xf32> to vector<4x15x16xf32>
    %5 = tpu.concatenate %4, %1 in 1 : vector<4x15x16xf32>, vector<4x1x16xf32> -> vector<4x16x16xf32>
    %cst_2 = arith.constant 2.000000e+00 : f32
    %6 = vector.broadcast %cst_2 : f32 to vector<4x16x16xf32>
    %7 = arith.mulf %6, %0 : vector<4x16x16xf32>
    %8 = arith.addf %3, %7 : vector<4x16x16xf32>
    %9 = arith.addf %8, %5 : vector<4x16x16xf32>
    %10 = arith.subf %3, %5 : vector<4x16x16xf32>
    %cst_3 = arith.constant 0.000000e+00 : f32
    %11 = vector.broadcast %cst_3 : f32 to vector<4x16x1xf32>
    %12 = vector.extract_strided_slice %9 {offsets = [0, 0, 0], sizes = [4, 16, 15], strides = [1, 1, 1]} : vector<4x16x16xf32> to vector<4x16x15xf32>
    %13 = tpu.concatenate %11, %12 in 2 : vector<4x16x1xf32>, vector<4x16x15xf32> -> vector<4x16x16xf32>
    %14 = vector.extract_strided_slice %9 {offsets = [0, 0, 1], sizes = [4, 16, 15], strides = [1, 1, 1]} : vector<4x16x16xf32> to vector<4x16x15xf32>
    %15 = tpu.concatenate %14, %11 in 2 : vector<4x16x15xf32>, vector<4x16x1xf32> -> vector<4x16x16xf32>
    %16 = vector.extract_strided_slice %10 {offsets = [0, 0, 0], sizes = [4, 16, 15], strides = [1, 1, 1]} : vector<4x16x16xf32> to vector<4x16x15xf32>
    %17 = tpu.concatenate %11, %16 in 2 : vector<4x16x1xf32>, vector<4x16x15xf32> -> vector<4x16x16xf32>
    %18 = vector.extract_strided_slice %10 {offsets = [0, 0, 1], sizes = [4, 16, 15], strides = [1, 1, 1]} : vector<4x16x16xf32> to vector<4x16x15xf32>
    %19 = tpu.concatenate %18, %11 in 2 : vector<4x16x15xf32>, vector<4x16x1xf32> -> vector<4x16x16xf32>
    %20 = arith.subf %13, %15 : vector<4x16x16xf32>
    %cst_4 = arith.constant 2.000000e+00 : f32
    %21 = vector.broadcast %cst_4 : f32 to vector<4x16x16xf32>
    %22 = arith.mulf %21, %10 : vector<4x16x16xf32>
    %23 = arith.addf %17, %22 : vector<4x16x16xf32>
    %24 = arith.addf %23, %19 : vector<4x16x16xf32>
    %25 = math.absf %20 : vector<4x16x16xf32>
    %26 = math.absf %24 : vector<4x16x16xf32>
    %27 = arith.addf %25, %26 : vector<4x16x16xf32>
    %c0_5 = arith.constant 0 : index
    %c0_6 = arith.constant 0 : index
    %c0_7 = arith.constant 0 : index
    %28 = vector.load %arg2[%c0_5, %c0_6, %c0_7] : memref<4x16x16xf32, #tpu.memory_space<vmem>>, vector<4x16x16xf32>
    tpu.vector_store %arg2[%c0_5, %c0_6, %c0_7], %27 {strides = array<i32>} : memref<4x16x16xf32, #tpu.memory_space<vmem>>, vector<4x16x16xf32>,
    return
  }
  func.func @transform_0(%arg0: i32) -> (i32, i32, i32) {
    %c0_i32 = arith.constant 0 : i32
    %c0_i32_0 = arith.constant 0 : i32
    %c0_i32_1 = arith.constant 0 : i32
    return %arg0, %c0_i32, %c0_i32_0 : i32, i32, i32
  }
  func.func @transform_1(%arg0: i32) -> (i32, i32, i32) {
    %c0_i32 = arith.constant 0 : i32
    %c0_i32_0 = arith.constant 0 : i32
    %c0_i32_1 = arith.constant 0 : i32
    return %arg0, %c0_i32, %c0_i32_0 : i32, i32, i32
  }
}

</mosaic_0001>

<llo_original>
// kernel: tpu_custom_call.1
$region0: #{tpu_custom_call.1}
  #allocation0 [shape = 'u32[]', space=smem, size = 0x4, offset = 0x4, fixed_abs, tag = 'smem constant byte address 0x4 - core index']
  #allocation1 [shape = 'u32[144,128]{1,0:T(1,128)}', space=vmem, size = 0x12000, scoped, tag = 'internal scratch']
  %s0 = inlined_call_operand.hbm [shape: f32[8,16,16], index: 0, kind: input, shape index: {}]
  %s1 = inlined_call_operand.hbm [shape: f32[8,16,16], index: 1, kind: output, shape index: {}]
  %s2 = sld [smem:[#allocation0]]
  $region41: #{tpu_custom_call.1} parent=0
    _
  %s4 = ssub.s32 1, %s2
  %s5 = scalar_select 0, %s4, %s2
  $region1: #{tpu_custom_call.1} parent=0
    #allocation2 [shape = 'u8[65536]{0}', space=vmem, size = 0x10000, scoped, tag = 'input window, operand 0']
    #allocation3 [shape = 's32[2]{0}', space=sflag, size = 0x8, scoped, tag = 'scoped memory for tpu_custom_call.1']
    #allocation4 [shape = 's32[2]{0}', space=sflag, size = 0x8, scoped, tag = 'scoped memory for tpu_custom_call.1']
    #allocation5 [shape = 'u8[65536]{0}', space=vmem, size = 0x10000, scoped, tag = 'output window, operand 0']
    %6 = vsyncpa [#allocation3], 0
    %s7 = scalar_lea.sflag [#allocation3], 1
    %8 = vsyncpa %s7, 0
    %9 = vsyncpa [#allocation4], 0
    %s10 = scalar_lea.sflag [#allocation4], 1
    %11 = vsyncpa %s10, 0
    loop: start=0, step=1, limit=4
    $region2: #{tpu_custom_call.1} parent=1 // loop_pre_header
      _
    $region3: #{tpu_custom_call.1} parent=1 // loop_header
      %s13 = sphi 0, %s17
      %p14 = scmp.ge.s32.totalorder %s13, 4
      %s23 = sphi 0, %s25
      %s26 = sphi 0, %s23
      %s27 = sphi 0, %s26
      %s43 = sphi 0, %s27
      %s49 = sphi 0, %s51
      %s52 = sphi 0, %s49
      %s53 = sphi 0, %s52
      %s69 = sphi 0, %s53
    $region4: #{tpu_custom_call.1} parent=1 // loop_header_branch
      %16 = sbr.rel (%p14) target = $region8
    $region5: #{tpu_custom_call.1} parent=1 // loop_body
      %s18 = ssub.s32 %s13, 1
      %s19 = ssub.s32 %s13, 2
      %s20 = sadd.s32 %s13, 1
      %s21 = ssub.s32 %s13, %s20
      %p22 = scmp.eq.s32.totalorder %s21, 0
      %s24 = sadd.s32 %s23, 1
      %s25 = scalar_select %p22, %s23, %s24
      %p28 = pneg %p22
      %p29 = scmp.eq.s32.totalorder %s13, 1
      %p30 = por %p28, %p29
      %p31 = scmp.ne.s32.totalorder %s23, %s26
      %p32 = scmp.eq.s32.totalorder %s13, 0
      %p33 = por %p31, %p32
      %p34 = scmp.ne.s32.totalorder %s23, %s26
      %p35 = scmp.eq.s32.totalorder %s18, 1
      %p36 = por %p34, %p35
      %p37 = scmp.ne.s32.totalorder %s26, %s27
      %p38 = scmp.eq.s32.totalorder %s18, 0
      %p39 = por %p37, %p38
      %p40 = scmp.ne.s32.totalorder %s26, %s27
      %p41 = scmp.eq.s32.totalorder %s19, 1
      %p42 = por %p40, %p41
      %p44 = scmp.ne.s32.totalorder %s27, %s43
      %p45 = scmp.eq.s32.totalorder %s19, 0
      %p46 = por %p44, %p45
      %s47 = ssub.s32 %s13, %s20
      %p48 = scmp.eq.s32.totalorder %s47, 0
      %s50 = sadd.s32 %s49, 1
      %s51 = scalar_select %p48, %s49, %s50
      %p54 = pneg %p48
      %p55 = scmp.eq.s32.totalorder %s13, 1
      %p56 = por %p54, %p55
      %p57 = scmp.ne.s32.totalorder %s49, %s52
      %p58 = scmp.eq.s32.totalorder %s13, 0
      %p59 = por %p57, %p58
      %p60 = scmp.ne.s32.totalorder %s49, %s52
      %p61 = scmp.eq.s32.totalorder %s18, 1
      %p62 = por %p60, %p61
      %p63 = scmp.ne.s32.totalorder %s52, %s53
      %p64 = scmp.eq.s32.totalorder %s18, 0
      %p65 = por %p63, %p64
      %p66 = scmp.ne.s32.totalorder %s52, %s53
      %p67 = scmp.eq.s32.totalorder %s19, 1
      %p68 = por %p66, %p67
      %p70 = scmp.ne.s32.totalorder %s53, %s69
      %p71 = scmp.eq.s32.totalorder %s19, 0
      %p72 = por %p70, %p71
      %p73 = scmp.le.s32.totalorder 1, %s13
      %p74 = scmp.lt.s32.totalorder %s13, 3
      %p75 = pnand %p73, %p74
      %p76 = pneg %p75
      // Predicated region
      $region9: #{tpu_custom_call.1} parent=5 // pred_check
        _
      $region10: #{tpu_custom_call.1} parent=5 // pred_check_branch
        %78 = sbr.rel (%p75) target = $region12
      $region11: #{tpu_custom_call.1} parent=5 // pred_region
        %s79 = ssub.s32 %s13, 1
      $region12: #{tpu_custom_call.1} parent=5 // pred_fallthru
        _
      %p80 = scmp.lt.s32.totalorder %s13, 2
      // Predicated region
      $region13: #{tpu_custom_call.1} parent=5 // pred_check
        %p81 = pneg %p80
      $region14: #{tpu_custom_call.1} parent=5 // pred_check_branch
        %83 = sbr.rel (%p81) target = $region16
      $region15: #{tpu_custom_call.1} parent=5 // pred_region
        // Predicated region
        $region17: #{tpu_custom_call.1} parent=15 // pred_check
          %p84 = pneg %p33
        $region18: #{tpu_custom_call.1} parent=15 // pred_check_branch
          %86 = sbr.rel (%p84) target = $region20
        $region19: #{tpu_custom_call.1} parent=15 // pred_region
          %s87 = sand.u32 %s23, 1
          %s88 = scalar_lea.sflag [#allocation3], %s87
          %s89 = sand.u32 %s23, 1
          %s90 = smul.addr %s89, 64
          %s91 = scalar_lea.vmem [#allocation2], %s90
          %s92 = smul.u32 4, %s13
          %s94 = ssub.s32 1024, 1024
          %95 = vsyncadd %s88, %s94
          %s96 = smul.addr %s92, 2
          %s97 = smul.addr %s96, 128
          %s98 = scalar_lea.hbm %s0, %s97
          %s99 = sshll.u32 %s91, 4
          %s100 = int_to_ptr.vmem [resolvable:$true] %s99
          %105 = dma.hbm_to_vmem [thread:$0]  %s98, 1024, %s100, %s88, 128, 128, 8
        $region20: #{tpu_custom_call.1} parent=15 // pred_fallthru
          _
      $region16: #{tpu_custom_call.1} parent=5 // pred_fallthru
        _
      %p106 = scmp.le.s32.totalorder 1, %s13
      %p107 = scmp.lt.s32.totalorder %s13, 3
      %p108 = pnand %p106, %p107
      %p109 = pneg %p108
      // Predicated region
      $region21: #{tpu_custom_call.1} parent=5 // pred_check
        _
      $region22: #{tpu_custom_call.1} parent=5 // pred_check_branch
        %111 = sbr.rel (%p108) target = $region24
      $region23: #{tpu_custom_call.1} parent=5 // pred_region
        %s112 = ssub.s32 %s13, 1
        %s113 = sand.u32 %s26, 1
        %s114 = scalar_lea.sflag [#allocation3], %s113
        %s115 = sand.u32 %s26, 1
        %s116 = smul.addr %s115, 64
        %s117 = scalar_lea.vmem [#allocation2], %s116
        // Predicated region
        $region25: #{tpu_custom_call.1} parent=23 // pred_check
          %p118 = pneg %p39
        $region26: #{tpu_custom_call.1} parent=23 // pred_check_branch
          %120 = sbr.rel (%p118) target = $region28
        $region27: #{tpu_custom_call.1} parent=23 // pred_region
          %121 = dma.done %s114, 1024
        $region28: #{tpu_custom_call.1} parent=23 // pred_fallthru
          _
        %s122 = sand.u32 %s26, 1
        %s123 = scalar_lea.sflag [#allocation3], %s122
        %s124 = sand.u32 %s26, 1
        %s125 = smul.addr %s124, 64
        %s126 = scalar_lea.vmem [#allocation2], %s125
        %p127 = pneg %p39
        %p128 = pneg %p36
        %p129 = pneg %p65
        %p130 = pneg %p62
        %s131 = sand.u32 %s52, 1
        %s132 = scalar_lea.sflag [#allocation4], %s131
        %s133 = sand.u32 %s52, 1
        %s134 = smul.addr %s133, 64
        %s135 = scalar_lea.vmem [#allocation5], %s134
        %s136 = smul.u32 4, %s18
        %s137 = smul.u32 4, %s18
        %v138 = vld [vmem:[%s117] sm:$0xff]
        %v139 = vld [vmem:[%s117 + $0x8] sm:$0xff]
        %v140 = vld [vmem:[%s117 + $0x10] sm:$0xff]
        %v141 = vld [vmem:[%s117 + $0x18] sm:$0xff]
        %v142 = vld [vmem:[%s117 + $0x20] sm:$0xff]
        %v143 = vld [vmem:[%s117 + $0x28] sm:$0xff]
        %v144 = vld [vmem:[%s117 + $0x30] sm:$0xff]
        %v145 = vld [vmem:[%s117 + $0x38] sm:$0xff]
        %vm154 = vcmask 1040384
        %v155 = vrot.slane %v138, 7
        %v156 = vrot.slane %v139, 7
        %v157 = vsel %vm154, %v155, %v156
        %v158 = vrot.slane %v140, 7
        %v159 = vrot.slane %v141, 7
        %v160 = vsel %vm154, %v158, %v159
        %v161 = vrot.slane %v142, 7
        %v162 = vrot.slane %v143, 7
        %v163 = vsel %vm154, %v161, %v162
        %v164 = vrot.slane %v144, 7
        %v165 = vrot.slane %v145, 7
        %v166 = vsel %vm154, %v164, %v165
        %v175 = vsel %vm154, 0.0, %v155
        %v176 = vsel %vm154, 0.0, %v158
        %v177 = vsel %vm154, 0.0, %v161
        %v178 = vsel %vm154, 0.0, %v164
        %vm179 = vcmask 1046528
        %v180 = vrot.slane %v138, 1
        %v181 = vrot.slane %v139, 1
        %v182 = vsel %vm179, %v180, %v181
        %v183 = vrot.slane %v140, 1
        %v184 = vrot.slane %v141, 1
        %v185 = vsel %vm179, %v183, %v184
        %v186 = vrot.slane %v142, 1
        %v187 = vrot.slane %v143, 1
        %v188 = vsel %vm179, %v186, %v187
        %v189 = vrot.slane %v144, 1
        %v190 = vrot.slane %v145, 1
        %v191 = vsel %vm179, %v189, %v190
        %v200 = vsel %vm179, %v181, 0.0
        %v201 = vsel %vm179, %v184, 0.0
        %v202 = vsel %vm179, %v187, 0.0
        %v203 = vsel %vm179, %v190, 0.0
        %v204 = vmul.f32 %v138, 2.0
        %v205 = vmul.f32 %v139, 2.0
        %v206 = vmul.f32 %v140, 2.0
        %v207 = vmul.f32 %v141, 2.0
        %v208 = vmul.f32 %v142, 2.0
        %v209 = vmul.f32 %v143, 2.0
        %v210 = vmul.f32 %v144, 2.0
        %v211 = vmul.f32 %v145, 2.0
        %v212 = vadd.f32 %v175, %v204
        %v213 = vadd.f32 %v157, %v205
        %v214 = vadd.f32 %v176, %v206
        %v215 = vadd.f32 %v160, %v207
        %v216 = vadd.f32 %v177, %v208
        %v217 = vadd.f32 %v163, %v209
        %v218 = vadd.f32 %v178, %v210
        %v219 = vadd.f32 %v166, %v211
        %v220 = vadd.f32 %v212, %v182
        %v221 = vadd.f32 %v213, %v200
        %v222 = vadd.f32 %v214, %v185
        %v223 = vadd.f32 %v215, %v201
        %v224 = vadd.f32 %v216, %v188
        %v225 = vadd.f32 %v217, %v202
        %v226 = vadd.f32 %v218, %v191
        %v227 = vadd.f32 %v219, %v203
        %v228 = vsub.f32 %v175, %v182
        %v229 = vsub.f32 %v157, %v200
        %v230 = vsub.f32 %v176, %v185
        %v231 = vsub.f32 %v160, %v201
        %v232 = vsub.f32 %v177, %v188
        %v233 = vsub.f32 %v163, %v202
        %v234 = vsub.f32 %v178, %v191
        %v235 = vsub.f32 %v166, %v203
        %244 = vrot.lane.b32.xlu0 %v220, 1
        %v245 = vpop.permute.xlu0 %244
        %246 = vrot.lane.b32.xlu0 %v221, 1
        %v247 = vpop.permute.xlu0 %246
        %248 = vrot.lane.b32.xlu0 %v222, 1
        %v249 = vpop.permute.xlu0 %248
        %250 = vrot.lane.b32.xlu0 %v223, 1
        %v251 = vpop.permute.xlu0 %250
        %252 = vrot.lane.b32.xlu0 %v224, 1
        %v253 = vpop.permute.xlu0 %252
        %254 = vrot.lane.b32.xlu0 %v225, 1
        %v255 = vpop.permute.xlu0 %254
        %256 = vrot.lane.b32.xlu0 %v226, 1
        %v257 = vpop.permute.xlu0 %256
        %258 = vrot.lane.b32.xlu0 %v227, 1
        %v259 = vpop.permute.xlu0 %258
        %vm268 = vcmask 7168
        %v269 = vsel %vm268, 0.0, %v245
        %v270 = vsel %vm268, 0.0, %v247
        %v271 = vsel %vm268, 0.0, %v249
        %v272 = vsel %vm268, 0.0, %v251
        %v273 = vsel %vm268, 0.0, %v253
        %v274 = vsel %vm268, 0.0, %v255
        %v275 = vsel %vm268, 0.0, %v257
        %v276 = vsel %vm268, 0.0, %v259
        %277 = vrot.lane.b32.xlu0 %v220, 127
        %v278 = vpop.permute.xlu0 %277
        %279 = vrot.lane.b32.xlu0 %v221, 127
        %v280 = vpop.permute.xlu0 %279
        %281 = vrot.lane.b32.xlu0 %v222, 127
        %v282 = vpop.permute.xlu0 %281
        %283 = vrot.lane.b32.xlu0 %v223, 127
        %v284 = vpop.permute.xlu0 %283
        %285 = vrot.lane.b32.xlu0 %v224, 127
        %v286 = vpop.permute.xlu0 %285
        %287 = vrot.lane.b32.xlu0 %v225, 127
        %v288 = vpop.permute.xlu0 %287
        %289 = vrot.lane.b32.xlu0 %v226, 127
        %v290 = vpop.permute.xlu0 %289
        %291 = vrot.lane.b32.xlu0 %v227, 127
        %v292 = vpop.permute.xlu0 %291
        %vm301 = vcmask 121856
        %v302 = vsel %vm301, %v278, 0.0
        %v303 = vsel %vm301, %v280, 0.0
        %v304 = vsel %vm301, %v282, 0.0
        %v305 = vsel %vm301, %v284, 0.0
        %v306 = vsel %vm301, %v286, 0.0
        %v307 = vsel %vm301, %v288, 0.0
        %v308 = vsel %vm301, %v290, 0.0
        %v309 = vsel %vm301, %v292, 0.0
        %318 = vrot.lane.b32.xlu0 %v228, 1
        %v319 = vpop.permute.xlu0 %318
        %320 = vrot.lane.b32.xlu0 %v229, 1
        %v321 = vpop.permute.xlu0 %320
        %322 = vrot.lane.b32.xlu0 %v230, 1
        %v323 = vpop.permute.xlu0 %322
        %324 = vrot.lane.b32.xlu0 %v231, 1
        %v325 = vpop.permute.xlu0 %324
        %326 = vrot.lane.b32.xlu0 %v232, 1
        %v327 = vpop.permute.xlu0 %326
        %328 = vrot.lane.b32.xlu0 %v233, 1
        %v329 = vpop.permute.xlu0 %328
        %330 = vrot.lane.b32.xlu0 %v234, 1
        %v331 = vpop.permute.xlu0 %330
        %332 = vrot.lane.b32.xlu0 %v235, 1
        %v333 = vpop.permute.xlu0 %332
        %v342 = vsel %vm268, 0.0, %v319
        %v343 = vsel %vm268, 0.0, %v321
        %v344 = vsel %vm268, 0.0, %v323
        %v345 = vsel %vm268, 0.0, %v325
        %v346 = vsel %vm268, 0.0, %v327
        %v347 = vsel %vm268, 0.0, %v329
        %v348 = vsel %vm268, 0.0, %v331
        %v349 = vsel %vm268, 0.0, %v333
        %350 = vrot.lane.b32.xlu0 %v228, 127
        %v351 = vpop.permute.xlu0 %350
        %352 = vrot.lane.b32.xlu0 %v229, 127
        %v353 = vpop.permute.xlu0 %352
        %354 = vrot.lane.b32.xlu0 %v230, 127
        %v355 = vpop.permute.xlu0 %354
        %356 = vrot.lane.b32.xlu0 %v231, 127
        %v357 = vpop.permute.xlu0 %356
        %358 = vrot.lane.b32.xlu0 %v232, 127
        %v359 = vpop.permute.xlu0 %358
        %360 = vrot.lane.b32.xlu0 %v233, 127
        %v361 = vpop.permute.xlu0 %360
        %362 = vrot.lane.b32.xlu0 %v234, 127
        %v363 = vpop.permute.xlu0 %362
        %364 = vrot.lane.b32.xlu0 %v235, 127
        %v365 = vpop.permute.xlu0 %364
        %v374 = vsel %vm301, %v351, 0.0
        %v375 = vsel %vm301, %v353, 0.0
        %v376 = vsel %vm301, %v355, 0.0
        %v377 = vsel %vm301, %v357, 0.0
        %v378 = vsel %vm301, %v359, 0.0
        %v379 = vsel %vm301, %v361, 0.0
        %v380 = vsel %vm301, %v363, 0.0
        %v381 = vsel %vm301, %v365, 0.0
        %v382 = vsub.f32 %v269, %v302
        %v383 = vsub.f32 %v270, %v303
        %v384 = vsub.f32 %v271, %v304
        %v385 = vsub.f32 %v272, %v305
        %v386 = vsub.f32 %v273, %v306
        %v387 = vsub.f32 %v274, %v307
        %v388 = vsub.f32 %v275, %v308
        %v389 = vsub.f32 %v276, %v309
        %v390 = vmul.f32 %v228, 2.0
        %v391 = vmul.f32 %v229, 2.0
        %v392 = vmul.f32 %v230, 2.0
        %v393 = vmul.f32 %v231, 2.0
        %v394 = vmul.f32 %v232, 2.0
        %v395 = vmul.f32 %v233, 2.0
        %v396 = vmul.f32 %v234, 2.0
        %v397 = vmul.f32 %v235, 2.0
        %v398 = vadd.f32 %v342, %v390
        %v399 = vadd.f32 %v343, %v391
        %v400 = vadd.f32 %v344, %v392
        %v401 = vadd.f32 %v345, %v393
        %v402 = vadd.f32 %v346, %v394
        %v403 = vadd.f32 %v347, %v395
        %v404 = vadd.f32 %v348, %v396
        %v405 = vadd.f32 %v349, %v397
        %v406 = vadd.f32 %v398, %v374
        %v407 = vadd.f32 %v399, %v375
        %v408 = vadd.f32 %v400, %v376
        %v409 = vadd.f32 %v401, %v377
        %v410 = vadd.f32 %v402, %v378
        %v411 = vadd.f32 %v403, %v379
        %v412 = vadd.f32 %v404, %v380
        %v413 = vadd.f32 %v405, %v381
        %v414 = vand.u32 2147483647, %v382
        %v415 = vand.u32 2147483647, %v383
        %v416 = vand.u32 2147483647, %v384
        %v417 = vand.u32 2147483647, %v385
        %v418 = vand.u32 2147483647, %v386
        %v419 = vand.u32 2147483647, %v387
        %v420 = vand.u32 2147483647, %v388
        %v421 = vand.u32 2147483647, %v389
        %v422 = vand.u32 2147483647, %v406
        %v423 = vand.u32 2147483647, %v407
        %v424 = vand.u32 2147483647, %v408
        %v425 = vand.u32 2147483647, %v409
        %v426 = vand.u32 2147483647, %v410
        %v427 = vand.u32 2147483647, %v411
        %v428 = vand.u32 2147483647, %v412
        %v429 = vand.u32 2147483647, %v413
        %v430 = vadd.f32 %v414, %v422
        %v431 = vadd.f32 %v415, %v423
        %v432 = vadd.f32 %v416, %v424
        %v433 = vadd.f32 %v417, %v425
        %v434 = vadd.f32 %v418, %v426
        %v435 = vadd.f32 %v419, %v427
        %v436 = vadd.f32 %v420, %v428
        %v437 = vadd.f32 %v421, %v429
        %vm438 = vcmask 130048
        %439 = vst.msk [vmem:[%s135] sm:$0xff] %vm438, %v430
        %440 = vst.msk [vmem:[%s135 + $0x8] sm:$0xff] %vm438, %v431
        %441 = vst.msk [vmem:[%s135 + $0x10] sm:$0xff] %vm438, %v432
        %442 = vst.msk [vmem:[%s135 + $0x18] sm:$0xff] %vm438, %v433
        %443 = vst.msk [vmem:[%s135 + $0x20] sm:$0xff] %vm438, %v434
        %444 = vst.msk [vmem:[%s135 + $0x28] sm:$0xff] %vm438, %v435
        %445 = vst.msk [vmem:[%s135 + $0x30] sm:$0xff] %vm438, %v436
        %446 = vst.msk [vmem:[%s135 + $0x38] sm:$0xff] %vm438, %v437
        %s447 = sand.u32 %s52, 1
        %s448 = scalar_lea.sflag [#allocation4], %s447
        %s449 = sand.u32 %s52, 1
        %s450 = smul.addr %s449, 64
        %s451 = scalar_lea.vmem [#allocation5], %s450
        // Predicated region
        $region29: #{tpu_custom_call.1} parent=23 // pred_check
          %p452 = pneg %p62
        $region30: #{tpu_custom_call.1} parent=23 // pred_check_branch
          %454 = sbr.rel (%p452) target = $region32
        $region31: #{tpu_custom_call.1} parent=23 // pred_region
          %s455 = smul.u32 4, %s18
          %s457 = ssub.s32 1024, 1024
          %458 = vsyncadd %s448, %s457
          %s459 = smul.addr %s455, 2
          %s460 = smul.addr %s459, 128
          %s461 = scalar_lea.hbm %s1, %s460
          %s462 = sshll.u32 %s451, 4
          %s463 = int_to_ptr.vmem [resolvable:$true] %s462
          %468 = dma.vmem_to_hbm [thread:$0]  %s463, 1024, %s461, %s448, 128, 128, 8
        $region32: #{tpu_custom_call.1} parent=23 // pred_fallthru
          _
      $region24: #{tpu_custom_call.1} parent=5 // pred_fallthru
        _
      %p469 = scmp.le.s32.totalorder 2, %s13
      // Predicated region
      $region33: #{tpu_custom_call.1} parent=5 // pred_check
        %p470 = pneg %p469
      $region34: #{tpu_custom_call.1} parent=5 // pred_check_branch
        %472 = sbr.rel (%p470) target = $region36
      $region35: #{tpu_custom_call.1} parent=5 // pred_region
        %s473 = ssub.s32 %s13, 2
        // Predicated region
        $region37: #{tpu_custom_call.1} parent=35 // pred_check
          %p474 = pneg %p68
        $region38: #{tpu_custom_call.1} parent=35 // pred_check_branch
          %476 = sbr.rel (%p474) target = $region40
        $region39: #{tpu_custom_call.1} parent=35 // pred_region
          %s477 = sand.u32 %s53, 1
          %s478 = scalar_lea.sflag [#allocation4], %s477
          %s479 = sand.u32 %s53, 1
          %s480 = smul.addr %s479, 64
          %s481 = scalar_lea.vmem [#allocation5], %s480
          %482 = dma.done %s478, 1024
        $region40: #{tpu_custom_call.1} parent=35 // pred_fallthru
          _
      $region36: #{tpu_custom_call.1} parent=5 // pred_fallthru
        _
    $region6: #{tpu_custom_call.1} parent=1 // loop_footer
      %s17 = sadd.s32 1, %s13
    $region7: #{tpu_custom_call.1} parent=1 // loop_footer_branch
      %12 = sbr.rel target = $region3
    $region8: #{tpu_custom_call.1} parent=1 // loop_exit
      _
    %483 = vsyncpa [#allocation3], 1
    %s484 = scalar_lea.sflag [#allocation3], 1
    %485 = vsyncpa %s484, 1
    %486 = vsyncpa [#allocation4], 1
    %s487 = scalar_lea.sflag [#allocation4], 1
    %488 = vsyncpa %s487, 1

</llo_original>
